<compile_context>
chip_gen: v7x
topology: tpu7x:2x2x1
jax: 0.10.0
libtpu: 0.0.40
codegen_flags: <defaults>
</compile_context>

<pallas_src>
import functools
import math

import jax
import jax.numpy as jnp
from jax.experimental import pallas as pl
from jax.experimental.pallas import tpu as pltpu


# ----------------------------- kernel ----------------------------------------
def _drop_path_kernel(x_ref, mask_ref, o_ref):
    """out = x * per-sample mask (mask broadcast across the feature/lane axis).

    x_ref    : VMEM (B, F_tile)  activations (flattened, lane-dense)
    mask_ref : VMEM (B, 1)       per-sample scaled keep mask
    o_ref    : VMEM (B, F_tile)  output
    """
    o_ref[...] = x_ref[...] * mask_ref[...]


# ----------------------------- pallas_call builder ----------------------------
# Cap on elements per input block (~4 MiB of f32); above this we grid over F.
_MAX_BLOCK_ELEMS = 1 << 20


@functools.lru_cache(maxsize=None)
def _build_drop_path_call(B, F, dtype_name):
    """Build (and cache) the jitted pallas_call for a given shape / dtype."""
    dtype = jnp.dtype(dtype_name)
    out_shape = jax.ShapeDtypeStruct((B, F), dtype)

    if F % 128 == 0 and B * F > _MAX_BLOCK_ELEMS:
        # Large, lane-aligned input: tile the feature axis.
        tile_f = max(128, min(F, _MAX_BLOCK_ELEMS // max(B, 1)))
        tile_f = (tile_f // 128) * 128
        call = pl.pallas_call(
            _drop_path_kernel,
            out_shape=out_shape,
            grid=(pl.cdiv(F, tile_f),),
            in_specs=[
                pl.BlockSpec((B, tile_f), lambda j: (0, j)),   # x tile
                pl.BlockSpec((B, 1), lambda j: (0, 0)),        # mask (same every step)
            ],
            out_specs=pl.BlockSpec((B, tile_f), lambda j: (0, j)),
            compiler_params=pltpu.CompilerParams(
                dimension_semantics=("parallel",)),
        )
    else:
        # Small input: one whole-slab block, no grid, no pipeline overhead.
        call = pl.pallas_call(
            _drop_path_kernel,
            out_shape=out_shape,
            in_specs=[
                pl.BlockSpec(memory_space=pltpu.MemorySpace.VMEM),  # x
                pl.BlockSpec(memory_space=pltpu.MemorySpace.VMEM),  # mask
            ],
            out_specs=pl.BlockSpec(memory_space=pltpu.MemorySpace.VMEM),
        )
    return jax.jit(call)


# ----------------------------- wrappers ---------------------------------------
def _make_mask(key, B, survival_prob, scale_by_survival, dtype):
    """Per-sample scaled keep mask of shape (B, 1), matching drop_path()."""
    keep = jax.random.bernoulli(key, survival_prob, (B, 1)).astype(dtype)
    if survival_prob > 0.0 and scale_by_survival:
        keep = keep * jnp.asarray(1.0 / survival_prob, dtype=dtype)
    return keep


def _drop_path_train(x, *, drop_rate, scale_by_survival=True, key=None):
    """Training-path DropPath. Returns (out, per-sample scaled mask (B, 1))."""
    survival_prob = 1.0 - float(drop_rate)
    if key is None:
        key = jax.random.PRNGKey(0)

    B = int(x.shape[0])
    F = int(math.prod(x.shape[1:])) if x.ndim > 1 else 1
    x2d = x.reshape(B, F)                       # lane-dense (B, F) slab

    mask = _make_mask(key, B, survival_prob, scale_by_survival, x.dtype)
    call = _build_drop_path_call(B, F, str(x2d.dtype))
    out2d = call(x2d, mask)
    return out2d.reshape(x.shape), mask


def drop_path_pallas(x, drop_rate=0.0, scale_by_survival=True, *,
                     training=True, key=None):
    """Matches DropPath.forward: identity in eval mode or when drop_rate == 0."""
    if (not training) or drop_rate == 0.0:
        return x
    out, _ = _drop_path_train(x, drop_rate=drop_rate,
                              scale_by_survival=scale_by_survival, key=key)
    return out


# ----------------------------- self-test --------------------------------------
if __name__ == "__main__":
    key = jax.random.PRNGKey(0)
    kx, k1, k2, k3 = jax.random.split(key, 4)
    x = jax.random.normal(kx, (2, 4, 16, 16), jnp.float32)   # B=2, F=4*16*16=1024

    drop_rate = 0.3
    survival_prob = 1.0 - drop_rate

    # --- training path (the actual Pallas kernel) -----------------------------
    out, mask = _drop_path_train(x, drop_rate=drop_rate,
                                 scale_by_survival=True, key=k1)
    out = jax.block_until_ready(out)
    m = mask[:, 0]                           # per-sample scaled keep mask, (B,)

    # each per-sample mask value must be 0 (dropped) or 1/survival_prob (kept)
    is_drop = jnp.abs(m) < 1e-6
    is_keep = jnp.abs(m - 1.0 / survival_prob) < 1e-5
    assert bool(jnp.all(is_drop | is_keep)), "mask values not in {0, 1/p}"

    # output must equal x * per-sample mask broadcast over all non-batch dims
    expected = x * m.reshape((x.shape[0],) + (1,) * (x.ndim - 1))
    assert jnp.allclose(out, expected, atol=1e-6, rtol=1e-6), "output != x * mask"

    # --- identity paths (eval mode / drop_rate == 0), exactly like PyTorch ----
    assert jnp.array_equal(
        drop_path_pallas(x, drop_rate=drop_rate, training=False), x)
    assert jnp.array_equal(
        drop_path_pallas(x, drop_rate=0.0, training=True, key=k2), x)

    # --- unscaled variant: mask values in {0, 1} -------------------------------
    out2, mask2 = _drop_path_train(x, drop_rate=drop_rate,
                                   scale_by_survival=False, key=k2)
    m2 = mask2[:, 0]
    assert bool(jnp.all((jnp.abs(m2) < 1e-6) | (jnp.abs(m2 - 1.0) < 1e-6)))
    expected2 = x * m2.reshape((x.shape[0],) + (1,) * (x.ndim - 1))
    assert jnp.allclose(out2, expected2, atol=1e-6, rtol=1e-6)

    # --- loose statistical sanity: empirical keep-rate near survival_prob ------
    keeps = []
    for s in range(64):
        _, mk = _drop_path_train(x, drop_rate=drop_rate,
                                 key=jax.random.fold_in(k3, s))
        keeps.append((mk[:, 0] > 0.5).astype(jnp.float32))
    keep_rate = float(jnp.mean(jnp.stack(keeps)))
    assert 0.5 < keep_rate < 0.9, f"implausible empirical keep rate {keep_rate}"

    print("KERNEL_OK")
</pallas_src>

<mosaic_0001>
module attributes {stable_mosaic.version = 11 : i64} {
  func.func @_drop_path_kernel(%arg0: memref<2x1024xf32, #tpu.memory_space<vmem>>, %arg1: memref<2x1xf32, #tpu.memory_space<vmem>>, %arg2: memref<2x1024xf32, #tpu.memory_space<vmem>>) attributes {dimension_semantics = [], scalar_prefetch = 0 : i64, scratch_operands = 0 : i64, tpu.core_type = #tpu.core_type<tc>} {
    %c0 = arith.constant 0 : index
    %c0_0 = arith.constant 0 : index
    %0 = vector.load %arg0[%c0, %c0_0] : memref<2x1024xf32, #tpu.memory_space<vmem>>, vector<2x1024xf32>
    %c0_1 = arith.constant 0 : index
    %c0_2 = arith.constant 0 : index
    %1 = vector.load %arg1[%c0_1, %c0_2] : memref<2x1xf32, #tpu.memory_space<vmem>>, vector<2x1xf32>
    %2 = vector.broadcast %1 : vector<2x1xf32> to vector<2x1024xf32>
    %3 = arith.mulf %0, %2 : vector<2x1024xf32>
    %c0_3 = arith.constant 0 : index
    %c0_4 = arith.constant 0 : index
    %4 = vector.load %arg2[%c0_3, %c0_4] : memref<2x1024xf32, #tpu.memory_space<vmem>>, vector<2x1024xf32>
    tpu.vector_store %arg2[%c0_3, %c0_4], %3 {strides = array<i32>} : memref<2x1024xf32, #tpu.memory_space<vmem>>, vector<2x1024xf32>,
    return
  }
}

</mosaic_0001>

<llo_original>
// kernel: tpu_custom_call.1
$region0: #{tpu_custom_call.1}
  #allocation0 [shape = 'u32[]', space=smem, size = 0x4, offset = 0x4, fixed_abs, tag = 'smem constant byte address 0x4 - core index']
  #allocation1 [shape = 'u32[144,128]{1,0:T(1,128)}', space=vmem, size = 0x12000, scoped, tag = 'internal scratch']
  %s0 = inlined_call_operand.hbm [shape: f32[2,1024], index: 0, kind: input, shape index: {}]
  %s1 = inlined_call_operand.vmem [shape: f32[2,1], index: 1, kind: input, shape index: {}]
  %s2 = inlined_call_operand.hbm [shape: f32[2,1024], index: 2, kind: output, shape index: {}]
  %s3 = sld [smem:[#allocation0]]
  $region22: #{tpu_custom_call.1} parent=0
    _
  %s5 = ssub.s32 1, %s3
  %s6 = scalar_select 0, %s5, %s3
  $region1: #{tpu_custom_call.1} parent=0
    #allocation2 [shape = 'u8[8192]{0}', space=vmem, size = 0x2000, scoped, tag = 'input window, operand 0, single buffered']
    #allocation3 [shape = 's32[1]{0}', space=sflag, size = 0x4, scoped, tag = 'scoped memory for tpu_custom_call.1']
    #allocation4 [shape = 's32[1]{0}', space=sflag, size = 0x4, scoped, tag = 'scoped memory for tpu_custom_call.1']
    #allocation5 [shape = 'u8[8192]{0}', space=vmem, size = 0x2000, scoped, tag = 'output window, operand 0, single buffered']
    %7 = vsyncpa [#allocation3], 0
    %8 = vsyncpa [#allocation4], 0
    // Predicated region
    $region2: #{tpu_custom_call.1} parent=1 // pred_check
      _
    $region3: #{tpu_custom_call.1} parent=1 // pred_check_branch
      %10 = sbr.rel (0) target = $region5
    $region4: #{tpu_custom_call.1} parent=1 // pred_region
      %s12 = ssub.s32 256, 256
      %13 = vsyncadd [#allocation3], %s12
      %s15 = sshll.u32 [#allocation2], 4
      %s16 = int_to_ptr.vmem [resolvable:$true] %s15
      %18 = dma.hbm_to_vmem [thread:$0]  %s0, 256, %s16, [#allocation3]
    $region5: #{tpu_custom_call.1} parent=1 // pred_fallthru
      _
    // Predicated region
    $region6: #{tpu_custom_call.1} parent=1 // pred_check
      _
    $region7: #{tpu_custom_call.1} parent=1 // pred_check_branch
      %20 = sbr.rel (0) target = $region9
    $region8: #{tpu_custom_call.1} parent=1 // pred_region
      _
    $region9: #{tpu_custom_call.1} parent=1 // pred_fallthru
      _
    // Predicated region
    $region10: #{tpu_custom_call.1} parent=1 // pred_check
      _
    $region11: #{tpu_custom_call.1} parent=1 // pred_check_branch
      %22 = sbr.rel (0) target = $region13
    $region12: #{tpu_custom_call.1} parent=1 // pred_region
      %23 = dma.done [#allocation3], 256
    $region13: #{tpu_custom_call.1} parent=1 // pred_fallthru
      _
    %v24 = vld [vmem:[#allocation2] sm:$0xff]
    %v25 = vld [vmem:[#allocation2 + $0x8] sm:$0xff]
    %v26 = vld [vmem:[%s1] sm:$0x3]
    %28 = vset.pattern.permute.xlu0 0
    %29 = vperm.xlu0 %28, %v26
    %v30 = vpop.permute.xlu0 %29
    %v32 = vunpack.c.l.s4 269488144
    %v33 = vunpack.c.0.s8 %v32
    %v34 = vlaneseq
    %v35 = vshrl.u32 %v34, 7
    %v36 = vsub.s32 %v33, %v35
    %v37 = vrot.slane %v30, %v36
    %v39 = vmul.f32 %v24, %v37
    %v40 = vmul.f32 %v25, %v37
    %41 = vst [vmem:[#allocation5] sm:$0xff] %v39
    %42 = vst [vmem:[#allocation5 + $0x8] sm:$0xff] %v40
    // Predicated region
    $region14: #{tpu_custom_call.1} parent=1 // pred_check
      _
    $region15: #{tpu_custom_call.1} parent=1 // pred_check_branch
      %44 = sbr.rel (0) target = $region17
    $region16: #{tpu_custom_call.1} parent=1 // pred_region
      %s46 = ssub.s32 256, 256
      %47 = vsyncadd [#allocation4], %s46
      %s49 = sshll.u32 [#allocation5], 4
      %s50 = int_to_ptr.vmem [resolvable:$true] %s49
      %52 = dma.vmem_to_hbm [thread:$0]  %s50, 256, %s2, [#allocation4]
    $region17: #{tpu_custom_call.1} parent=1 // pred_fallthru
      _
    // Predicated region
    $region18: #{tpu_custom_call.1} parent=1 // pred_check
      _
    $region19: #{tpu_custom_call.1} parent=1 // pred_check_branch
      %54 = sbr.rel (0) target = $region21
    $region20: #{tpu_custom_call.1} parent=1 // pred_region
      %55 = dma.done [#allocation4], 256
    $region21: #{tpu_custom_call.1} parent=1 // pred_fallthru
      _
    %56 = vsyncpa [#allocation3], 1
    %57 = vsyncpa [#allocation4], 1

</llo_original>
